<compile_context>
chip_gen: v7x
topology: tpu7x:2x2x1
jax: 0.10.0
libtpu: 0.0.40
codegen_flags: <defaults>
</compile_context>

<pallas_src>
import jax
import jax.numpy as jnp
from jax.experimental import pallas as pl
from jax.experimental.pallas import tpu as pltpu

INPUT_SIZE = 63        # logical feature dim (PyTorch spec)
HIDDEN_SIZE = 128
NUM_CLASSES = 2        # logical output dim
OUT_PAD = 128          # lane-dense padded output width (bf16 stores)

TILE_B_MAX = 4096      # batch tile (multiple of 8 sublanes)
VMEM_LIMIT_BYTES = 32 * 1024 * 1024


def _mlp_kernel(x_ref, w1_ref, b1_ref, w2_ref, b2_ref, out_ref):
    # x_ref:  [tb, 63]   f32   (cast to bf16 here -- no wrapper copy of x)
    # w1_ref: [63, 128]  bf16
    # b1_ref: [1, 128]   f32
    # w2_ref: [128, 128] bf16  (columns >= NUM_CLASSES are zero)
    # b2_ref: [1, 128]   f32   (columns >= NUM_CLASSES are zero)
    # out_ref:[tb, 128]  bf16  (lane-dense store; sliced to [:, :2] outside)
    x = x_ref[...].astype(jnp.bfloat16)
    h = jnp.dot(x, w1_ref[...], preferred_element_type=jnp.float32)    # MXU, f32 acc
    h = jnp.maximum(h + b1_ref[...], 0.0).astype(jnp.bfloat16)         # bias + ReLU (VPU)
    o = jnp.dot(h, w2_ref[...], preferred_element_type=jnp.float32)    # MXU, f32 acc
    out_ref[...] = (o + b2_ref[...]).astype(jnp.bfloat16)              # lane-dense bf16 store


def _candidate_semantics():
    cands = []
    for name in ("CORE_PARALLEL", "PARALLEL", "ARBITRARY"):
        val = getattr(pltpu, name, None)
        if val is not None:
            cands.append((val,))
    return tuple(cands) if cands else (("arbitrary",),)


_SEMANTICS_CANDIDATES = _candidate_semantics()
_validated_semantics = None


def _run_with_semantics_fallback(call_fn):
    """Prefer CORE_PARALLEL (splits the batch grid across v7x's two TensorCores);
    fall back to PARALLEL / ARBITRARY if the chip or toolchain rejects it."""
    global _validated_semantics
    if _validated_semantics is not None:
        try:
            return call_fn(_validated_semantics)
        except Exception:
            pass  # cached choice rejected for this shape -> re-probe below
    err = None
    for sem in _SEMANTICS_CANDIDATES:
        try:
            out = call_fn(sem)
            jax.block_until_ready(out)      # surface compile *and* runtime errors
            _validated_semantics = sem
            return out
        except Exception as e:              # fall back to the next semantics
            err = e
    raise err


def gesture_model_forward(x, w1, b1, w2, b2, tile_b: int = TILE_B_MAX):
    """x: [B, 63] f32.  w1: [63,128], b1: [128], w2: [128,2], b2: [2] (all f32).
    Returns logits [B, 2] f32 (bf16 MXU feeds, f32 accumulation)."""
    B = x.shape[0]
    if x.dtype != jnp.float32:
        x = x.astype(jnp.float32)

    # Tiny one-time weight prep (bf16 quantization + lane-dense padding of fc2).
    w1b = w1.astype(jnp.bfloat16)                                   # [63, 128]
    b1r = b1.reshape(1, HIDDEN_SIZE).astype(jnp.float32)            # [1, 128]
    w2p = jnp.zeros((HIDDEN_SIZE, OUT_PAD), jnp.bfloat16)
    w2p = w2p.at[:, :NUM_CLASSES].set(w2.astype(jnp.bfloat16))      # [128, 128]
    b2p = jnp.zeros((1, OUT_PAD), jnp.float32)
    b2p = b2p.at[0, :NUM_CLASSES].set(b2.astype(jnp.float32))       # [1, 128]

    # Batch tiling: one full-size block for small B, otherwise a multiple of 8
    # sublanes; the ragged last block is handled by Pallas (no jnp.pad copy).
    if B <= tile_b:
        tb = B
    else:
        tb = max(8, (tile_b // 8) * 8)
    grid = (pl.cdiv(B, tb),)

    def call(dim_semantics):
        return pl.pallas_call(
            _mlp_kernel,
            out_shape=jax.ShapeDtypeStruct((B, OUT_PAD), jnp.bfloat16),
            grid=grid,
            in_specs=[
                pl.BlockSpec((tb, INPUT_SIZE), lambda i: (i, 0)),           # x (batch-tiled)
                pl.BlockSpec((INPUT_SIZE, HIDDEN_SIZE), lambda i: (0, 0)),  # w1 (VMEM-resident)
                pl.BlockSpec((1, HIDDEN_SIZE), lambda i: (0, 0)),           # b1
                pl.BlockSpec((HIDDEN_SIZE, OUT_PAD), lambda i: (0, 0)),     # w2 (padded cols)
                pl.BlockSpec((1, OUT_PAD), lambda i: (0, 0)),               # b2 (padded cols)
            ],
            out_specs=pl.BlockSpec((tb, OUT_PAD), lambda i: (i, 0)),
            compiler_params=pltpu.CompilerParams(
                dimension_semantics=dim_semantics,
                vmem_limit_bytes=VMEM_LIMIT_BYTES,
            ),
        )(x, w1b, b1r, w2p, b2p)

    out = _run_with_semantics_fallback(call)
    return out[:, :NUM_CLASSES].astype(jnp.float32)


def init_params(key):
    """Deterministic init mirroring nn.Linear's U(-1/sqrt(fan_in), 1/sqrt(fan_in)).
    Weights stored as [in, out] (transposed vs. PyTorch's [out, in]) for x @ W."""
    k1, k2, k3, k4 = jax.random.split(key, 4)
    lim1 = 1.0 / jnp.sqrt(jnp.float32(INPUT_SIZE))
    lim2 = 1.0 / jnp.sqrt(jnp.float32(HIDDEN_SIZE))
    w1 = jax.random.uniform(k1, (INPUT_SIZE, HIDDEN_SIZE), jnp.float32, -lim1, lim1)
    b1 = jax.random.uniform(k2, (HIDDEN_SIZE,), jnp.float32, -lim1, lim1)
    w2 = jax.random.uniform(k3, (HIDDEN_SIZE, NUM_CLASSES), jnp.float32, -lim2, lim2)
    b2 = jax.random.uniform(k4, (NUM_CLASSES,), jnp.float32, -lim2, lim2)
    return w1, b1, w2, b2


def reference_forward_f32(x, w1, b1, w2, b2):
    h = jnp.maximum(x @ w1 + b1.reshape(1, -1), 0.0)
    return h @ w2 + b2.reshape(1, -1)


def reference_forward_bf16(x, w1, b1, w2, b2):
    """Reference matching the kernel's bf16-input / f32-accumulate numerics."""
    xb, w1b, w2b = (a.astype(jnp.bfloat16) for a in (x, w1, w2))
    h = jnp.dot(xb, w1b, preferred_element_type=jnp.float32) + b1.reshape(1, -1)
    h = jnp.maximum(h, 0.0).astype(jnp.bfloat16)
    return jnp.dot(h, w2b, preferred_element_type=jnp.float32) + b2.reshape(1, -1)


if __name__ == "__main__":
    key = jax.random.PRNGKey(0)
    k_params, k_x1, k_x2 = jax.random.split(key, 3)
    w1, b1, w2, b2 = init_params(k_params)

    # Small batch: single-block path (block dims == full array dims).
    B = 8
    x = jax.random.normal(k_x1, (B, INPUT_SIZE), jnp.float32)
    out = jax.block_until_ready(gesture_model_forward(x, w1, b1, w2, b2))
    assert out.shape == (B, NUM_CLASSES)
    ref_q = reference_forward_bf16(x, w1, b1, w2, b2)
    assert jnp.allclose(out, ref_q, atol=2e-2, rtol=2e-2), "mismatch vs bf16 reference"

    # Larger ragged batch with a small tile: multi-block grid + ragged last block.
    B2 = 200
    x2 = jax.random.normal(k_x2, (B2, INPUT_SIZE), jnp.float32)
    out2 = jax.block_until_ready(gesture_model_forward(x2, w1, b1, w2, b2, tile_b=128))
    assert out2.shape == (B2, NUM_CLASSES)
    ref2_q = reference_forward_bf16(x2, w1, b1, w2, b2)
    assert jnp.allclose(out2, ref2_q, atol=2e-2, rtol=2e-2), "mismatch (tiled/ragged path)"

    # Informational: deviation from the pure-f32 PyTorch-equivalent forward.
    ref_f = reference_forward_f32(x2, w1, b1, w2, b2)
    _ = float(jnp.max(jnp.abs(out2 - ref_f)))  # bf16-feed quantization error, typically O(1e-2)

    print("KERNEL_OK")
</pallas_src>

<mosaic_0001>
module attributes {stable_mosaic.version = 11 : i64} {
  func.func @_mlp_kernel(%arg0: i32, %arg1: memref<8x63xf32, #tpu.memory_space<vmem>>, %arg2: memref<63x128xbf16, #tpu.memory_space<vmem>>, %arg3: memref<1x128xf32, #tpu.memory_space<vmem>>, %arg4: memref<128x128xbf16, #tpu.memory_space<vmem>>, %arg5: memref<1x128xf32, #tpu.memory_space<vmem>>, %arg6: memref<8x128xbf16, #tpu.memory_space<vmem>>) attributes {dimension_semantics = [#tpu.dimension_semantics<core_parallel>], iteration_bounds = array<i64: 1>, scalar_prefetch = 0 : i64, scratch_operands = 0 : i64, tpu.core_type = #tpu.core_type<tc>, window_params = [{transform_indices = @transform_0, window_bounds = array<i64: 8, 63>}, {pipeline_mode = #tpu.pipeline_mode<synchronous>, transform_indices = @transform_1, window_bounds = array<i64: 63, 128>}, {pipeline_mode = #tpu.pipeline_mode<synchronous>, transform_indices = @transform_2, window_bounds = array<i64: 1, 128>}, {pipeline_mode = #tpu.pipeline_mode<synchronous>, transform_indices = @transform_3, window_bounds = array<i64: 128, 128>}, {pipeline_mode = #tpu.pipeline_mode<synchronous>, transform_indices = @transform_4, window_bounds = array<i64: 1, 128>}, {transform_indices = @transform_5, window_bounds = array<i64: 8, 128>}]} {
    %c0 = arith.constant 0 : index
    %c0_0 = arith.constant 0 : index
    %0 = vector.load %arg1[%c0, %c0_0] : memref<8x63xf32, #tpu.memory_space<vmem>>, vector<8x63xf32>
    %1 = arith.truncf %0 : vector<8x63xf32> to vector<8x63xbf16>
    %c0_1 = arith.constant 0 : index
    %c0_2 = arith.constant 0 : index
    %2 = vector.load %arg2[%c0_1, %c0_2] : memref<63x128xbf16, #tpu.memory_space<vmem>>, vector<63x128xbf16>
    %cst = arith.constant dense<0.000000e+00> : vector<8x128xf32>
    %3 = tpu.matmul %1, %2, %cst {dimension_numbers = #tpu.dot_dimension_numbers<[1], [0], [0], [1], [0, 0, 1, 1], [], []>} : vector<8x63xbf16>, vector<63x128xbf16>, vector<8x128xf32> -> vector<8x128xf32>
    %c0_3 = arith.constant 0 : index
    %c0_4 = arith.constant 0 : index
    %4 = vector.load %arg3[%c0_3, %c0_4] : memref<1x128xf32, #tpu.memory_space<vmem>>, vector<1x128xf32>
    %5 = vector.broadcast %4 : vector<1x128xf32> to vector<8x128xf32>
    %6 = arith.addf %3, %5 : vector<8x128xf32>
    %cst_5 = arith.constant 0.000000e+00 : f32
    %7 = vector.broadcast %cst_5 : f32 to vector<8x128xf32>
    %8 = arith.maximumf %6, %7 : vector<8x128xf32>
    %9 = arith.truncf %8 : vector<8x128xf32> to vector<8x128xbf16>
    %c0_6 = arith.constant 0 : index
    %c0_7 = arith.constant 0 : index
    %10 = vector.load %arg4[%c0_6, %c0_7] : memref<128x128xbf16, #tpu.memory_space<vmem>>, vector<128x128xbf16>
    %cst_8 = arith.constant dense<0.000000e+00> : vector<8x128xf32>
    %11 = tpu.matmul %9, %10, %cst_8 {dimension_numbers = #tpu.dot_dimension_numbers<[1], [0], [0], [1], [0, 0, 1, 1], [], []>} : vector<8x128xbf16>, vector<128x128xbf16>, vector<8x128xf32> -> vector<8x128xf32>
    %c0_9 = arith.constant 0 : index
    %c0_10 = arith.constant 0 : index
    %12 = vector.load %arg5[%c0_9, %c0_10] : memref<1x128xf32, #tpu.memory_space<vmem>>, vector<1x128xf32>
    %13 = vector.broadcast %12 : vector<1x128xf32> to vector<8x128xf32>
    %14 = arith.addf %11, %13 : vector<8x128xf32>
    %15 = arith.truncf %14 : vector<8x128xf32> to vector<8x128xbf16>
    %c0_11 = arith.constant 0 : index
    %c0_12 = arith.constant 0 : index
    %16 = vector.load %arg6[%c0_11, %c0_12] : memref<8x128xbf16, #tpu.memory_space<vmem>>, vector<8x128xbf16>
    tpu.vector_store %arg6[%c0_11, %c0_12], %15 {strides = array<i32>} : memref<8x128xbf16, #tpu.memory_space<vmem>>, vector<8x128xbf16>,
    return
  }
  func.func @transform_0(%arg0: i32) -> (i32, i32) {
    %c0_i32 = arith.constant 0 : i32
    %c0_i32_0 = arith.constant 0 : i32
    return %arg0, %c0_i32 : i32, i32
  }
  func.func @transform_1(%arg0: i32) -> (i32, i32) {
    %c0_i32 = arith.constant 0 : i32
    %c0_i32_0 = arith.constant 0 : i32
    %c0_i32_1 = arith.constant 0 : i32
    return %c0_i32, %c0_i32_0 : i32, i32
  }
  func.func @transform_2(%arg0: i32) -> (i32, i32) {
    %c0_i32 = arith.constant 0 : i32
    %c0_i32_0 = arith.constant 0 : i32
    %c0_i32_1 = arith.constant 0 : i32
    return %c0_i32, %c0_i32_0 : i32, i32
  }
  func.func @transform_3(%arg0: i32) -> (i32, i32) {
    %c0_i32 = arith.constant 0 : i32
    %c0_i32_0 = arith.constant 0 : i32
    %c0_i32_1 = arith.constant 0 : i32
    return %c0_i32, %c0_i32_0 : i32, i32
  }
  func.func @transform_4(%arg0: i32) -> (i32, i32) {
    %c0_i32 = arith.constant 0 : i32
    %c0_i32_0 = arith.constant 0 : i32
    %c0_i32_1 = arith.constant 0 : i32
    return %c0_i32, %c0_i32_0 : i32, i32
  }
  func.func @transform_5(%arg0: i32) -> (i32, i32) {
    %c0_i32 = arith.constant 0 : i32
    %c0_i32_0 = arith.constant 0 : i32
    return %arg0, %c0_i32 : i32, i32
  }
}

module attributes {stable_mosaic.version = 11 : i64} {
  func.func @_mlp_kernel(%arg0: i32, %arg1: memref<8x63xf32, #tpu.memory_space<vmem>>, %arg2: memref<63x128xbf16, #tpu.memory_space<vmem>>, %arg3: memref<1x128xf32, #tpu.memory_space<vmem>>, %arg4: memref<128x128xbf16, #tpu.memory_space<vmem>>, %arg5: memref<1x128xf32, #tpu.memory_space<vmem>>, %arg6: memref<8x128xbf16, #tpu.memory_space<vmem>>) attributes {dimension_semantics = [#tpu.dimension_semantics<parallel>], iteration_bounds = array<i64: 1>, scalar_prefetch = 0 : i64, scratch_operands = 0 : i64, tpu.core_type = #tpu.core_type<tc>, window_params = [{transform_indices = @transform_0, window_bounds = array<i64: 8, 63>}, {pipeline_mode = #tpu.pipeline_mode<synchronous>, transform_indices = @transform_1, window_bounds = array<i64: 63, 128>}, {pipeline_mode = #tpu.pipeline_mode<synchronous>, transform_indices = @transform_2, window_bounds = array<i64: 1, 128>}, {pipeline_mode = #tpu.pipeline_mode<synchronous>, transform_indices = @transform_3, window_bounds = array<i64: 128, 128>}, {pipeline_mode = #tpu.pipeline_mode<synchronous>, transform_indices = @transform_4, window_bounds = array<i64: 1, 128>}, {transform_indices = @transform_5, window_bounds = array<i64: 8, 128>}]} {
    %c0 = arith.constant 0 : index
    %c0_0 = arith.constant 0 : index
    %0 = vector.load %arg1[%c0, %c0_0] : memref<8x63xf32, #tpu.memory_space<vmem>>, vector<8x63xf32>
    %1 = arith.truncf %0 : vector<8x63xf32> to vector<8x63xbf16>
    %c0_1 = arith.constant 0 : index
    %c0_2 = arith.constant 0 : index
    %2 = vector.load %arg2[%c0_1, %c0_2] : memref<63x128xbf16, #tpu.memory_space<vmem>>, vector<63x128xbf16>
    %cst = arith.constant dense<0.000000e+00> : vector<8x128xf32>
    %3 = tpu.matmul %1, %2, %cst {dimension_numbers = #tpu.dot_dimension_numbers<[1], [0], [0], [1], [0, 0, 1, 1], [], []>} : vector<8x63xbf16>, vector<63x128xbf16>, vector<8x128xf32> -> vector<8x128xf32>
    %c0_3 = arith.constant 0 : index
    %c0_4 = arith.constant 0 : index
    %4 = vector.load %arg3[%c0_3, %c0_4] : memref<1x128xf32, #tpu.memory_space<vmem>>, vector<1x128xf32>
    %5 = vector.broadcast %4 : vector<1x128xf32> to vector<8x128xf32>
    %6 = arith.addf %3, %5 : vector<8x128xf32>
    %cst_5 = arith.constant 0.000000e+00 : f32
    %7 = vector.broadcast %cst_5 : f32 to vector<8x128xf32>
    %8 = arith.maximumf %6, %7 : vector<8x128xf32>
    %9 = arith.truncf %8 : vector<8x128xf32> to vector<8x128xbf16>
    %c0_6 = arith.constant 0 : index
    %c0_7 = arith.constant 0 : index
    %10 = vector.load %arg4[%c0_6, %c0_7] : memref<128x128xbf16, #tpu.memory_space<vmem>>, vector<128x128xbf16>
    %cst_8 = arith.constant dense<0.000000e+00> : vector<8x128xf32>
    %11 = tpu.matmul %9, %10, %cst_8 {dimension_numbers = #tpu.dot_dimension_numbers<[1], [0], [0], [1], [0, 0, 1, 1], [], []>} : vector<8x128xbf16>, vector<128x128xbf16>, vector<8x128xf32> -> vector<8x128xf32>
    %c0_9 = arith.constant 0 : index
    %c0_10 = arith.constant 0 : index
    %12 = vector.load %arg5[%c0_9, %c0_10] : memref<1x128xf32, #tpu.memory_space<vmem>>, vector<1x128xf32>
    %13 = vector.broadcast %12 : vector<1x128xf32> to vector<8x128xf32>
    %14 = arith.addf %11, %13 : vector<8x128xf32>
    %15 = arith.truncf %14 : vector<8x128xf32> to vector<8x128xbf16>
    %c0_11 = arith.constant 0 : index
    %c0_12 = arith.constant 0 : index
    %16 = vector.load %arg6[%c0_11, %c0_12] : memref<8x128xbf16, #tpu.memory_space<vmem>>, vector<8x128xbf16>
    tpu.vector_store %arg6[%c0_11, %c0_12], %15 {strides = array<i32>} : memref<8x128xbf16, #tpu.memory_space<vmem>>, vector<8x128xbf16>,
    return
  }
  func.func @transform_0(%arg0: i32) -> (i32, i32) {
    %c0_i32 = arith.constant 0 : i32
    %c0_i32_0 = arith.constant 0 : i32
    return %arg0, %c0_i32 : i32, i32
  }
  func.func @transform_1(%arg0: i32) -> (i32, i32) {
    %c0_i32 = arith.constant 0 : i32
    %c0_i32_0 = arith.constant 0 : i32
    %c0_i32_1 = arith.constant 0 : i32
    return %c0_i32, %c0_i32_0 : i32, i32
  }
  func.func @transform_2(%arg0: i32) -> (i32, i32) {
    %c0_i32 = arith.constant 0 : i32
    %c0_i32_0 = arith.constant 0 : i32
    %c0_i32_1 = arith.constant 0 : i32
    return %c0_i32, %c0_i32_0 : i32, i32
  }
  func.func @transform_3(%arg0: i32) -> (i32, i32) {
    %c0_i32 = arith.constant 0 : i32
    %c0_i32_0 = arith.constant 0 : i32
    %c0_i32_1 = arith.constant 0 : i32
    return %c0_i32, %c0_i32_0 : i32, i32
  }
  func.func @transform_4(%arg0: i32) -> (i32, i32) {
    %c0_i32 = arith.constant 0 : i32
    %c0_i32_0 = arith.constant 0 : i32
    %c0_i32_1 = arith.constant 0 : i32
    return %c0_i32, %c0_i32_0 : i32, i32
  }
  func.func @transform_5(%arg0: i32) -> (i32, i32) {
    %c0_i32 = arith.constant 0 : i32
    %c0_i32_0 = arith.constant 0 : i32
    return %arg0, %c0_i32 : i32, i32
  }
}

module attributes {stable_mosaic.version = 11 : i64} {
  func.func @_mlp_kernel(%arg0: i32, %arg1: memref<8x63xf32, #tpu.memory_space<vmem>>, %arg2: memref<63x128xbf16, #tpu.memory_space<vmem>>, %arg3: memref<1x128xf32, #tpu.memory_space<vmem>>, %arg4: memref<128x128xbf16, #tpu.memory_space<vmem>>, %arg5: memref<1x128xf32, #tpu.memory_space<vmem>>, %arg6: memref<8x128xbf16, #tpu.memory_space<vmem>>) attributes {dimension_semantics = [#tpu.dimension_semantics<arbitrary>], iteration_bounds = array<i64: 1>, scalar_prefetch = 0 : i64, scratch_operands = 0 : i64, tpu.core_type = #tpu.core_type<tc>, window_params = [{transform_indices = @transform_0, window_bounds = array<i64: 8, 63>}, {pipeline_mode = #tpu.pipeline_mode<synchronous>, transform_indices = @transform_1, window_bounds = array<i64: 63, 128>}, {pipeline_mode = #tpu.pipeline_mode<synchronous>, transform_indices = @transform_2, window_bounds = array<i64: 1, 128>}, {pipeline_mode = #tpu.pipeline_mode<synchronous>, transform_indices = @transform_3, window_bounds = array<i64: 128, 128>}, {pipeline_mode = #tpu.pipeline_mode<synchronous>, transform_indices = @transform_4, window_bounds = array<i64: 1, 128>}, {transform_indices = @transform_5, window_bounds = array<i64: 8, 128>}]} {
    %c0 = arith.constant 0 : index
    %c0_0 = arith.constant 0 : index
    %0 = vector.load %arg1[%c0, %c0_0] : memref<8x63xf32, #tpu.memory_space<vmem>>, vector<8x63xf32>
    %1 = arith.truncf %0 : vector<8x63xf32> to vector<8x63xbf16>
    %c0_1 = arith.constant 0 : index
    %c0_2 = arith.constant 0 : index
    %2 = vector.load %arg2[%c0_1, %c0_2] : memref<63x128xbf16, #tpu.memory_space<vmem>>, vector<63x128xbf16>
    %cst = arith.constant dense<0.000000e+00> : vector<8x128xf32>
    %3 = tpu.matmul %1, %2, %cst {dimension_numbers = #tpu.dot_dimension_numbers<[1], [0], [0], [1], [0, 0, 1, 1], [], []>} : vector<8x63xbf16>, vector<63x128xbf16>, vector<8x128xf32> -> vector<8x128xf32>
    %c0_3 = arith.constant 0 : index
    %c0_4 = arith.constant 0 : index
    %4 = vector.load %arg3[%c0_3, %c0_4] : memref<1x128xf32, #tpu.memory_space<vmem>>, vector<1x128xf32>
    %5 = vector.broadcast %4 : vector<1x128xf32> to vector<8x128xf32>
    %6 = arith.addf %3, %5 : vector<8x128xf32>
    %cst_5 = arith.constant 0.000000e+00 : f32
    %7 = vector.broadcast %cst_5 : f32 to vector<8x128xf32>
    %8 = arith.maximumf %6, %7 : vector<8x128xf32>
    %9 = arith.truncf %8 : vector<8x128xf32> to vector<8x128xbf16>
    %c0_6 = arith.constant 0 : index
    %c0_7 = arith.constant 0 : index
    %10 = vector.load %arg4[%c0_6, %c0_7] : memref<128x128xbf16, #tpu.memory_space<vmem>>, vector<128x128xbf16>
    %cst_8 = arith.constant dense<0.000000e+00> : vector<8x128xf32>
    %11 = tpu.matmul %9, %10, %cst_8 {dimension_numbers = #tpu.dot_dimension_numbers<[1], [0], [0], [1], [0, 0, 1, 1], [], []>} : vector<8x128xbf16>, vector<128x128xbf16>, vector<8x128xf32> -> vector<8x128xf32>
    %c0_9 = arith.constant 0 : index
    %c0_10 = arith.constant 0 : index
    %12 = vector.load %arg5[%c0_9, %c0_10] : memref<1x128xf32, #tpu.memory_space<vmem>>, vector<1x128xf32>
    %13 = vector.broadcast %12 : vector<1x128xf32> to vector<8x128xf32>
    %14 = arith.addf %11, %13 : vector<8x128xf32>
    %15 = arith.truncf %14 : vector<8x128xf32> to vector<8x128xbf16>
    %c0_11 = arith.constant 0 : index
    %c0_12 = arith.constant 0 : index
    %16 = vector.load %arg6[%c0_11, %c0_12] : memref<8x128xbf16, #tpu.memory_space<vmem>>, vector<8x128xbf16>
    tpu.vector_store %arg6[%c0_11, %c0_12], %15 {strides = array<i32>} : memref<8x128xbf16, #tpu.memory_space<vmem>>, vector<8x128xbf16>,
    return
  }
  func.func @transform_0(%arg0: i32) -> (i32, i32) {
    %c0_i32 = arith.constant 0 : i32
    %c0_i32_0 = arith.constant 0 : i32
    return %arg0, %c0_i32 : i32, i32
  }
  func.func @transform_1(%arg0: i32) -> (i32, i32) {
    %c0_i32 = arith.constant 0 : i32
    %c0_i32_0 = arith.constant 0 : i32
    %c0_i32_1 = arith.constant 0 : i32
    return %c0_i32, %c0_i32_0 : i32, i32
  }
  func.func @transform_2(%arg0: i32) -> (i32, i32) {
    %c0_i32 = arith.constant 0 : i32
    %c0_i32_0 = arith.constant 0 : i32
    %c0_i32_1 = arith.constant 0 : i32
    return %c0_i32, %c0_i32_0 : i32, i32
  }
  func.func @transform_3(%arg0: i32) -> (i32, i32) {
    %c0_i32 = arith.constant 0 : i32
    %c0_i32_0 = arith.constant 0 : i32
    %c0_i32_1 = arith.constant 0 : i32
    return %c0_i32, %c0_i32_0 : i32, i32
  }
  func.func @transform_4(%arg0: i32) -> (i32, i32) {
    %c0_i32 = arith.constant 0 : i32
    %c0_i32_0 = arith.constant 0 : i32
    %c0_i32_1 = arith.constant 0 : i32
    return %c0_i32, %c0_i32_0 : i32, i32
  }
  func.func @transform_5(%arg0: i32) -> (i32, i32) {
    %c0_i32 = arith.constant 0 : i32
    %c0_i32_0 = arith.constant 0 : i32
    return %arg0, %c0_i32 : i32, i32
  }
}

</mosaic_0001>

<llo_original>
// kernel: tpu_custom_call.1
$region0: #{tpu_custom_call.1}
  #allocation0 [shape = 'u32[]', space=smem, size = 0x4, offset = 0x4, fixed_abs, tag = 'smem constant byte address 0x4 - core index']
  #allocation1 [shape = 'u32[144,128]{1,0:T(1,128)}', space=vmem, size = 0x12000, scoped, tag = 'internal scratch']
  %s0 = inlined_call_operand.hbm [shape: f32[8,63], index: 0, kind: input, shape index: {}]
  %s1 = inlined_call_operand.hbm [shape: bf16[63,128], index: 1, kind: input, shape index: {}]
  %s2 = inlined_call_operand.vmem [shape: f32[1,128], index: 2, kind: input, shape index: {}]
  %s3 = inlined_call_operand.hbm [shape: bf16[128,128], index: 3, kind: input, shape index: {}]
  %s4 = inlined_call_operand.vmem [shape: f32[1,128], index: 4, kind: input, shape index: {}]
  %s5 = inlined_call_operand.hbm [shape: bf16[8,128], index: 5, kind: output, shape index: {}]
  %s6 = sld [smem:[#allocation0]]
  $region42: #{tpu_custom_call.1} parent=0
    _
  %s8 = ssub.s32 1, %s6
  %s9 = scalar_select 0, %s8, %s6
  $region1: #{tpu_custom_call.1} parent=0
    #allocation2 [shape = 'u8[4096]{0}', space=vmem, size = 0x1000, scoped, tag = 'input window, operand 0, single buffered']
    #allocation3 [shape = 's32[1]{0}', space=sflag, size = 0x4, scoped, tag = 'scoped memory for tpu_custom_call.1']
    #allocation4 [shape = 's32[1]{0}', space=sflag, size = 0x4, scoped, tag = 'scoped memory for tpu_custom_call.1']
    #allocation5 [shape = 'u8[16384]{0}', space=vmem, size = 0x4000, scoped, tag = 'input window, operand 1, single buffered']
    #allocation6 [shape = 's32[1]{0}', space=sflag, size = 0x4, scoped, tag = 'scoped memory for tpu_custom_call.1']
    #allocation7 [shape = 'u8[32768]{0}', space=vmem, size = 0x8000, scoped, tag = 'input window, operand 3, single buffered']
    #allocation8 [shape = 'u8[2048]{0}', space=vmem, size = 0x800, scoped, tag = 'output window, operand 0, single buffered']
    %10 = vsyncpa [#allocation3], 0
    %11 = vsyncpa [#allocation6], 0
    %12 = vsyncpa [#allocation4], 0
    // Predicated region
    $region2: #{tpu_custom_call.1} parent=1 // pred_check
      _
    $region3: #{tpu_custom_call.1} parent=1 // pred_check_branch
      %14 = sbr.rel (0) target = $region5
    $region4: #{tpu_custom_call.1} parent=1 // pred_region
      %s16 = ssub.s32 128, 128
      %17 = vsyncadd [#allocation3], %s16
      %s18 = smul.addr %s9, 128
      %s19 = scalar_lea.hbm %s0, %s18
      %s21 = sshll.u32 [#allocation2], 4
      %s22 = int_to_ptr.vmem [resolvable:$true] %s21
      %24 = dma.hbm_to_vmem [thread:$0]  %s19, 128, %s22, [#allocation3]
    $region5: #{tpu_custom_call.1} parent=1 // pred_fallthru
      _
    // Predicated region
    $region6: #{tpu_custom_call.1} parent=1 // pred_check
      _
    $region7: #{tpu_custom_call.1} parent=1 // pred_check_branch
      %26 = sbr.rel (0) target = $region9
    $region8: #{tpu_custom_call.1} parent=1 // pred_region
      %s28 = ssub.s32 512, 512
      %29 = vsyncadd [#allocation6], %s28
      %s30 = sshll.u32 [#allocation5], 4
      %s31 = int_to_ptr.vmem [resolvable:$true] %s30
      %36 = dma.hbm_to_vmem [thread:$0]  %s1, 512, %s31, [#allocation6], 64, 64, 4
    $region9: #{tpu_custom_call.1} parent=1 // pred_fallthru
      _
    // Predicated region
    $region10: #{tpu_custom_call.1} parent=1 // pred_check
      _
    $region11: #{tpu_custom_call.1} parent=1 // pred_check_branch
      %38 = sbr.rel (0) target = $region13
    $region12: #{tpu_custom_call.1} parent=1 // pred_region
      _
    $region13: #{tpu_custom_call.1} parent=1 // pred_fallthru
      _
    // Predicated region
    $region14: #{tpu_custom_call.1} parent=1 // pred_check
      _
    $region15: #{tpu_custom_call.1} parent=1 // pred_check_branch
      %40 = sbr.rel (0) target = $region17
    $region16: #{tpu_custom_call.1} parent=1 // pred_region
      %s42 = ssub.s32 1024, 1024
      %43 = vsyncadd [#allocation6], %s42
      %s44 = sshll.u32 [#allocation7], 4
      %s45 = int_to_ptr.vmem [resolvable:$true] %s44
      %50 = dma.hbm_to_vmem [thread:$0]  %s3, 1024, %s45, [#allocation6], 64, 64, 4
    $region17: #{tpu_custom_call.1} parent=1 // pred_fallthru
      _
    // Predicated region
    $region18: #{tpu_custom_call.1} parent=1 // pred_check
      _
    $region19: #{tpu_custom_call.1} parent=1 // pred_check_branch
      %52 = sbr.rel (0) target = $region21
    $region20: #{tpu_custom_call.1} parent=1 // pred_region
      _
    $region21: #{tpu_custom_call.1} parent=1 // pred_fallthru
      _
    // Predicated region
    $region22: #{tpu_custom_call.1} parent=1 // pred_check
      _
    $region23: #{tpu_custom_call.1} parent=1 // pred_check_branch
      %54 = sbr.rel (0) target = $region25
    $region24: #{tpu_custom_call.1} parent=1 // pred_region
      %55 = dma.done [#allocation3], 128
    $region25: #{tpu_custom_call.1} parent=1 // pred_fallthru
      _
    // Predicated region
    $region26: #{tpu_custom_call.1} parent=1 // pred_check
      _
    $region27: #{tpu_custom_call.1} parent=1 // pred_check_branch
      %57 = sbr.rel (0) target = $region29
    $region28: #{tpu_custom_call.1} parent=1 // pred_region
      %58 = dma.done [#allocation6], 512
    $region29: #{tpu_custom_call.1} parent=1 // pred_fallthru
      _
    // Predicated region
    $region30: #{tpu_custom_call.1} parent=1 // pred_check
      _
    $region31: #{tpu_custom_call.1} parent=1 // pred_check_branch
      %60 = sbr.rel (0) target = $region33
    $region32: #{tpu_custom_call.1} parent=1 // pred_region
      %61 = dma.done [#allocation6], 1024
    $region33: #{tpu_custom_call.1} parent=1 // pred_fallthru
      _
    %v63 = vld [vmem:[#allocation2] sm:$0xff]
    %v64 = vpack.c.bf16 %v63, %v63
    %v65 = vld [vmem:[#allocation5] sm:$0xf]
    %v66 = vld [vmem:[#allocation5 + $0x4] sm:$0xf]
    %v67 = vld [vmem:[#allocation5 + $0x8] sm:$0xf]
    %v68 = vld [vmem:[#allocation5 + $0xc] sm:$0xf]
    %v69 = vld [vmem:[#allocation5 + $0x10] sm:$0xf]
    %v70 = vld [vmem:[#allocation5 + $0x14] sm:$0xf]
    %v71 = vld [vmem:[#allocation5 + $0x18] sm:$0xf]
    %v72 = vld [vmem:[#allocation5 + $0x1c] sm:$0xf]
    %v73 = vld [vmem:[%s2] sm:$0x1]
    %v75 = vlaneseq
    %v76 = vshrl.u32 %v75, 7
    %v77 = vsub.s32 0, %v76
    %v78 = vrot.slane %v73, %v77
    %v88 = vunpack.c.l.b16 %v65
    %v89 = vunpack.c.l.b16 %v66
    %v90 = vunpack.c.l.b16 %v67
    %v91 = vunpack.c.l.b16 %v68
    %v92 = vunpack.c.l.b16 %v69
    %v93 = vunpack.c.l.b16 %v70
    %v94 = vunpack.c.l.b16 %v71
    %v95 = vunpack.c.l.b16 %v72
    %v96 = vpack.c.b16 %v89, %v88
    %v97 = vpack.c.b16 %v91, %v90
    %v98 = vpack.c.b16 %v93, %v92
    %v99 = vpack.c.b16 %v95, %v94
    %vm103 = vcmask 515072
    %v105 = vsel %vm103, %v64, 0
    %vm107 = vcmask 1046528
    %vm108 = vcmask 1047552
    %v109 = vsel %vm107, 4294967295, 65535
    %v110 = vsel %vm108, %v109, 0
    %v112 = vand.u32 %v99, %v110
    %114 = vmatprep.subr.bf16.mxu0 0
    %115 = vmatpush1.bf16.msra.mxu0 %v96
    %116 = vmatprep.subr.bf16.mxu0 0
    %117 = vmatpush1.bf16.msra.mxu0 %v97
    %118 = vmatprep.subr.bf16.mxu0 0
    %119 = vmatpush1.bf16.msra.mxu0 %v98
    %120 = vmatprep.subr.bf16.mxu0 0
    %121 = vmatpush1.bf16.msra.mxu0 %v112
    %122 = vmatprep.subr.bf16.mxu0 0
    %123 = vmatpush1.bf16.msra.mxu0 0
    %124 = vmatprep.subr.bf16.mxu0 0
    %125 = vmatpush1.bf16.msra.mxu0 0
    %126 = vmatprep.subr.bf16.mxu0 0
    %127 = vmatpush1.bf16.msra.mxu0 0
    %128 = vmatprep.subr.bf16.mxu0 0
    %129 = vmatpush1.bf16.msra.mxu0 0
    %130 = vmatprep.subr.bf16.mxu0 0
    %131 = vmatpush1.bf16.msra.mxu0 0
    %132 = vmatprep.subr.bf16.mxu0 0
    %133 = vmatpush1.bf16.msra.mxu0 0
    %134 = vmatprep.subr.bf16.mxu0 0
    %135 = vmatpush1.bf16.msra.mxu0 0
    %136 = vmatprep.subr.bf16.mxu0 0
    %137 = vmatpush1.bf16.msra.mxu0 0
    %138 = vmatprep.subr.bf16.mxu0 0
    %139 = vmatpush1.bf16.msra.mxu0 0
    %140 = vmatprep.subr.bf16.mxu0 0
    %141 = vmatpush1.bf16.msra.mxu0 0
    %142 = vmatprep.subr.bf16.mxu0 0
    %143 = vmatpush1.bf16.msra.mxu0 0
    %144 = vmatprep.subr.bf16.mxu0 0
    %145 = vmatpush1.bf16.msra.mxu0 0
    %146 = vmatprep.mubr.bf16.mxu0 0
    %147 = vmatmul.mubr.bf16.gmra.mrb[0].mxu0 %v105
    %v148 = vpop.f32.mrb[0].mxu0
    %v149 = vadd.f32 %v78, %v148
    %v150 = vpop.f32.mrb[0].mxu0
    %v151 = vpop.f32.mrb[0].mxu0
    %v152 = vpop.f32.mrb[0].mxu0
    %153 = vdwg.mxu0
    %v154 = vmax.f32 %v149, 0.0
    %v155 = vpack.c.bf16 %v154, %v154
    %v156 = vld [vmem:[#allocation7] sm:$0xf]
    %v157 = vld [vmem:[#allocation7 + $0x4] sm:$0xf]
    %v158 = vld [vmem:[#allocation7 + $0x8] sm:$0xf]
    %v159 = vld [vmem:[#allocation7 + $0xc] sm:$0xf]
    %v160 = vld [vmem:[#allocation7 + $0x10] sm:$0xf]
    %v161 = vld [vmem:[#allocation7 + $0x14] sm:$0xf]
    %v162 = vld [vmem:[#allocation7 + $0x18] sm:$0xf]
    %v163 = vld [vmem:[#allocation7 + $0x1c] sm:$0xf]
    %v164 = vld [vmem:[#allocation7 + $0x20] sm:$0xf]
    %v165 = vld [vmem:[#allocation7 + $0x24] sm:$0xf]
    %v166 = vld [vmem:[#allocation7 + $0x28] sm:$0xf]
    %v167 = vld [vmem:[#allocation7 + $0x2c] sm:$0xf]
    %v168 = vld [vmem:[#allocation7 + $0x30] sm:$0xf]
    %v169 = vld [vmem:[#allocation7 + $0x34] sm:$0xf]
    %v170 = vld [vmem:[#allocation7 + $0x38] sm:$0xf]
    %v171 = vld [vmem:[#allocation7 + $0x3c] sm:$0xf]
    %v172 = vld [vmem:[%s4] sm:$0x1]
    %v174 = vlaneseq
    %v175 = vshrl.u32 %v174, 7
    %v176 = vsub.s32 0, %v175
    %v177 = vrot.slane %v172, %v176
    %v195 = vunpack.c.l.b16 %v156
    %v196 = vunpack.c.l.b16 %v157
    %v197 = vunpack.c.l.b16 %v158
    %v198 = vunpack.c.l.b16 %v159
    %v199 = vunpack.c.l.b16 %v160
    %v200 = vunpack.c.l.b16 %v161
    %v201 = vunpack.c.l.b16 %v162
    %v202 = vunpack.c.l.b16 %v163
    %v203 = vunpack.c.l.b16 %v164
    %v204 = vunpack.c.l.b16 %v165
    %v205 = vunpack.c.l.b16 %v166
    %v206 = vunpack.c.l.b16 %v167
    %v207 = vunpack.c.l.b16 %v168
    %v208 = vunpack.c.l.b16 %v169
    %v209 = vunpack.c.l.b16 %v170
    %v210 = vunpack.c.l.b16 %v171
    %v211 = vpack.c.b16 %v196, %v195
    %v212 = vpack.c.b16 %v198, %v197
    %v213 = vpack.c.b16 %v200, %v199
    %v214 = vpack.c.b16 %v202, %v201
    %v215 = vpack.c.b16 %v204, %v203
    %v216 = vpack.c.b16 %v206, %v205
    %v217 = vpack.c.b16 %v208, %v207
    %v218 = vpack.c.b16 %v210, %v209
    %227 = vmatprep.subr.bf16.mxu0 0
    %228 = vmatpush1.bf16.msra.mxu0 %v211
    %229 = vmatprep.subr.bf16.mxu0 0
    %230 = vmatpush1.bf16.msra.mxu0 %v212
    %231 = vmatprep.subr.bf16.mxu0 0
    %232 = vmatpush1.bf16.msra.mxu0 %v213
    %233 = vmatprep.subr.bf16.mxu0 0
    %234 = vmatpush1.bf16.msra.mxu0 %v214
    %235 = vmatprep.subr.bf16.mxu0 0
    %236 = vmatpush1.bf16.msra.mxu0 %v215
    %237 = vmatprep.subr.bf16.mxu0 0
    %238 = vmatpush1.bf16.msra.mxu0 %v216
    %239 = vmatprep.subr.bf16.mxu0 0
    %240 = vmatpush1.bf16.msra.mxu0 %v217
    %241 = vmatprep.subr.bf16.mxu0 0
    %242 = vmatpush1.bf16.msra.mxu0 %v218
    %243 = vmatprep.subr.bf16.mxu0 0
    %244 = vmatpush1.bf16.msra.mxu0 0
    %245 = vmatprep.subr.bf16.mxu0 0
    %246 = vmatpush1.bf16.msra.mxu0 0
    %247 = vmatprep.subr.bf16.mxu0 0
    %248 = vmatpush1.bf16.msra.mxu0 0
    %249 = vmatprep.subr.bf16.mxu0 0
    %250 = vmatpush1.bf16.msra.mxu0 0
    %251 = vmatprep.subr.bf16.mxu0 0
    %252 = vmatpush1.bf16.msra.mxu0 0
    %253 = vmatprep.subr.bf16.mxu0 0
    %254 = vmatpush1.bf16.msra.mxu0 0
    %255 = vmatprep.subr.bf16.mxu0 0
    %256 = vmatpush1.bf16.msra.mxu0 0
    %257 = vmatprep.subr.bf16.mxu0 0
    %258 = vmatpush1.bf16.msra.mxu0 0
    %259 = vmatprep.mubr.bf16.mxu0 0
    %260 = vmatmul.mubr.bf16.gmra.mrb[0].mxu0 %v155
    %v261 = vpop.f32.mrb[0].mxu0
    %v262 = vadd.f32 %v177, %v261
    %v263 = vpop.f32.mrb[0].mxu0
    %v264 = vpop.f32.mrb[0].mxu0
    %v265 = vpop.f32.mrb[0].mxu0
    %266 = vdwg.mxu0
    %v267 = vpack.c.bf16 %v262, %v262
    %268 = vst [vmem:[#allocation8] sm:$0xf] %v267
    // Predicated region
    $region34: #{tpu_custom_call.1} parent=1 // pred_check
      _
    $region35: #{tpu_custom_call.1} parent=1 // pred_check_branch
      %270 = sbr.rel (0) target = $region37
    $region36: #{tpu_custom_call.1} parent=1 // pred_region
      %s272 = ssub.s32 64, 64
      %273 = vsyncadd [#allocation4], %s272
      %s274 = smul.addr %s9, 64
      %s275 = scalar_lea.hbm %s5, %s274
      %s277 = sshll.u32 [#allocation8], 4
      %s278 = int_to_ptr.vmem [resolvable:$true] %s277
      %280 = dma.vmem_to_hbm [thread:$0]  %s278, 64, %s275, [#allocation4]
    $region37: #{tpu_custom_call.1} parent=1 // pred_fallthru
      _
    // Predicated region
    $region38: #{tpu_custom_call.1} parent=1 // pred_check
      _
    $region39: #{tpu_custom_call.1} parent=1 // pred_check_branch
      %282 = sbr.rel (0) target = $region41
    $region40: #{tpu_custom_call.1} parent=1 // pred_region
      %283 = dma.done [#allocation4], 64
    $region41: #{tpu_custom_call.1} parent=1 // pred_fallthru
      _
    %284 = vsyncpa [#allocation3], 1
    %285 = vsyncpa [#allocation6], 1
    %286 = vsyncpa [#allocation4], 1

// kernel: tpu_custom_call.1
$region0: #{tpu_custom_call.1}
  #allocation0 [shape = 'u32[]', space=smem, size = 0x4, offset = 0x4, fixed_abs, tag = 'smem constant byte address 0x4 - core index']
  #allocation1 [shape = 'u32[144,128]{1,0:T(1,128)}', space=vmem, size = 0x12000, scoped, tag = 'internal scratch']
  %s0 = inlined_call_operand.hbm [shape: f32[8,63], index: 0, kind: input, shape index: {}]
  %s1 = inlined_call_operand.hbm [shape: bf16[63,128], index: 1, kind: input, shape index: {}]
  %s2 = inlined_call_operand.vmem [shape: f32[1,128], index: 2, kind: input, shape index: {}]
  %s3 = inlined_call_operand.hbm [shape: bf16[128,128], index: 3, kind: input, shape index: {}]
  %s4 = inlined_call_operand.vmem [shape: f32[1,128], index: 4, kind: input, shape index: {}]
  %s5 = inlined_call_operand.hbm [shape: bf16[8,128], index: 5, kind: output, shape index: {}]
  %s6 = sld [smem:[#allocation0]]
  $region42: #{tpu_custom_call.1} parent=0
    _
  %s8 = ssub.s32 1, %s6
  %s9 = scalar_select 0, %s8, %s6
  $region1: #{tpu_custom_call.1} parent=0
    #allocation2 [shape = 'u8[4096]{0}', space=vmem, size = 0x1000, scoped, tag = 'input window, operand 0, single buffered']
    #allocation3 [shape = 's32[1]{0}', space=sflag, size = 0x4, scoped, tag = 'scoped memory for tpu_custom_call.1']
    #allocation4 [shape = 's32[1]{0}', space=sflag, size = 0x4, scoped, tag = 'scoped memory for tpu_custom_call.1']
    #allocation5 [shape = 'u8[16384]{0}', space=vmem, size = 0x4000, scoped, tag = 'input window, operand 1, single buffered']
    #allocation6 [shape = 's32[1]{0}', space=sflag, size = 0x4, scoped, tag = 'scoped memory for tpu_custom_call.1']
    #allocation7 [shape = 'u8[32768]{0}', space=vmem, size = 0x8000, scoped, tag = 'input window, operand 3, single buffered']
    #allocation8 [shape = 'u8[2048]{0}', space=vmem, size = 0x800, scoped, tag = 'output window, operand 0, single buffered']
    %10 = vsyncpa [#allocation3], 0
    %11 = vsyncpa [#allocation6], 0
    %12 = vsyncpa [#allocation4], 0
    // Predicated region
    $region2: #{tpu_custom_call.1} parent=1 // pred_check
      _
    $region3: #{tpu_custom_call.1} parent=1 // pred_check_branch
      %14 = sbr.rel (0) target = $region5
    $region4: #{tpu_custom_call.1} parent=1 // pred_region
      %s16 = ssub.s32 128, 128
      %17 = vsyncadd [#allocation3], %s16
      %s19 = sshll.u32 [#allocation2], 4
      %s20 = int_to_ptr.vmem [resolvable:$true] %s19
      %22 = dma.hbm_to_vmem [thread:$0]  %s0, 128, %s20, [#allocation3]
    $region5: #{tpu_custom_call.1} parent=1 // pred_fallthru
      _
    // Predicated region
    $region6: #{tpu_custom_call.1} parent=1 // pred_check
      _
    $region7: #{tpu_custom_call.1} parent=1 // pred_check_branch
      %24 = sbr.rel (0) target = $region9
    $region8: #{tpu_custom_call.1} parent=1 // pred_region
      %s26 = ssub.s32 512, 512
      %27 = vsyncadd [#allocation6], %s26
      %s28 = sshll.u32 [#allocation5], 4
      %s29 = int_to_ptr.vmem [resolvable:$true] %s28
      %34 = dma.hbm_to_vmem [thread:$0]  %s1, 512, %s29, [#allocation6], 64, 64, 4
    $region9: #{tpu_custom_call.1} parent=1 // pred_fallthru
      _
    // Predicated region
    $region10: #{tpu_custom_call.1} parent=1 // pred_check
      _
    $region11: #{tpu_custom_call.1} parent=1 // pred_check_branch
      %36 = sbr.rel (0) target = $region13
    $region12: #{tpu_custom_call.1} parent=1 // pred_region
      _
    $region13: #{tpu_custom_call.1} parent=1 // pred_fallthru
      _
    // Predicated region
    $region14: #{tpu_custom_call.1} parent=1 // pred_check
      _
    $region15: #{tpu_custom_call.1} parent=1 // pred_check_branch
      %38 = sbr.rel (0) target = $region17
    $region16: #{tpu_custom_call.1} parent=1 // pred_region
      %s40 = ssub.s32 1024, 1024
      %41 = vsyncadd [#allocation6], %s40
      %s42 = sshll.u32 [#allocation7], 4
      %s43 = int_to_ptr.vmem [resolvable:$true] %s42
      %48 = dma.hbm_to_vmem [thread:$0]  %s3, 1024, %s43, [#allocation6], 64, 64, 4
    $region17: #{tpu_custom_call.1} parent=1 // pred_fallthru
      _
    // Predicated region
    $region18: #{tpu_custom_call.1} parent=1 // pred_check
      _
    $region19: #{tpu_custom_call.1} parent=1 // pred_check_branch
      %50 = sbr.rel (0) target = $region21
    $region20: #{tpu_custom_call.1} parent=1 // pred_region
      _
    $region21: #{tpu_custom_call.1} parent=1 // pred_fallthru
      _
    // Predicated region
    $region22: #{tpu_custom_call.1} parent=1 // pred_check
      _
    $region23: #{tpu_custom_call.1} parent=1 // pred_check_branch
      %52 = sbr.rel (0) target = $region25
    $region24: #{tpu_custom_call.1} parent=1 // pred_region
      %53 = dma.done [#allocation3], 128
    $region25: #{tpu_custom_call.1} parent=1 // pred_fallthru
      _
    // Predicated region
    $region26: #{tpu_custom_call.1} parent=1 // pred_check
      _
    $region27: #{tpu_custom_call.1} parent=1 // pred_check_branch
      %55 = sbr.rel (0) target = $region29
    $region28: #{tpu_custom_call.1} parent=1 // pred_region
      %56 = dma.done [#allocation6], 512
    $region29: #{tpu_custom_call.1} parent=1 // pred_fallthru
      _
    // Predicated region
    $region30: #{tpu_custom_call.1} parent=1 // pred_check
      _
    $region31: #{tpu_custom_call.1} parent=1 // pred_check_branch
      %58 = sbr.rel (0) target = $region33
    $region32: #{tpu_custom_call.1} parent=1 // pred_region
      %59 = dma.done [#allocation6], 1024
    $region33: #{tpu_custom_call.1} parent=1 // pred_fallthru
      _
    %v61 = vld [vmem:[#allocation2] sm:$0xff]
    %v62 = vpack.c.bf16 %v61, %v61
    %v63 = vld [vmem:[#allocation5] sm:$0xf]
    %v64 = vld [vmem:[#allocation5 + $0x4] sm:$0xf]
    %v65 = vld [vmem:[#allocation5 + $0x8] sm:$0xf]
    %v66 = vld [vmem:[#allocation5 + $0xc] sm:$0xf]
    %v67 = vld [vmem:[#allocation5 + $0x10] sm:$0xf]
    %v68 = vld [vmem:[#allocation5 + $0x14] sm:$0xf]
    %v69 = vld [vmem:[#allocation5 + $0x18] sm:$0xf]
    %v70 = vld [vmem:[#allocation5 + $0x1c] sm:$0xf]
    %v71 = vld [vmem:[%s2] sm:$0x1]
    %v73 = vlaneseq
    %v74 = vshrl.u32 %v73, 7
    %v75 = vsub.s32 0, %v74
    %v76 = vrot.slane %v71, %v75
    %v86 = vunpack.c.l.b16 %v63
    %v87 = vunpack.c.l.b16 %v64
    %v88 = vunpack.c.l.b16 %v65
    %v89 = vunpack.c.l.b16 %v66
    %v90 = vunpack.c.l.b16 %v67
    %v91 = vunpack.c.l.b16 %v68
    %v92 = vunpack.c.l.b16 %v69
    %v93 = vunpack.c.l.b16 %v70
    %v94 = vpack.c.b16 %v87, %v86
    %v95 = vpack.c.b16 %v89, %v88
    %v96 = vpack.c.b16 %v91, %v90
    %v97 = vpack.c.b16 %v93, %v92
    %vm101 = vcmask 515072
    %v103 = vsel %vm101, %v62, 0
    %vm105 = vcmask 1046528
    %vm106 = vcmask 1047552
    %v107 = vsel %vm105, 4294967295, 65535
    %v108 = vsel %vm106, %v107, 0
    %v110 = vand.u32 %v97, %v108
    %112 = vmatprep.subr.bf16.mxu0 0
    %113 = vmatpush1.bf16.msra.mxu0 %v94
    %114 = vmatprep.subr.bf16.mxu0 0
    %115 = vmatpush1.bf16.msra.mxu0 %v95
    %116 = vmatprep.subr.bf16.mxu0 0
    %117 = vmatpush1.bf16.msra.mxu0 %v96
    %118 = vmatprep.subr.bf16.mxu0 0
    %119 = vmatpush1.bf16.msra.mxu0 %v110
    %120 = vmatprep.subr.bf16.mxu0 0
    %121 = vmatpush1.bf16.msra.mxu0 0
    %122 = vmatprep.subr.bf16.mxu0 0
    %123 = vmatpush1.bf16.msra.mxu0 0
    %124 = vmatprep.subr.bf16.mxu0 0
    %125 = vmatpush1.bf16.msra.mxu0 0
    %126 = vmatprep.subr.bf16.mxu0 0
    %127 = vmatpush1.bf16.msra.mxu0 0
    %128 = vmatprep.subr.bf16.mxu0 0
    %129 = vmatpush1.bf16.msra.mxu0 0
    %130 = vmatprep.subr.bf16.mxu0 0
    %131 = vmatpush1.bf16.msra.mxu0 0
    %132 = vmatprep.subr.bf16.mxu0 0
    %133 = vmatpush1.bf16.msra.mxu0 0
    %134 = vmatprep.subr.bf16.mxu0 0
    %135 = vmatpush1.bf16.msra.mxu0 0
    %136 = vmatprep.subr.bf16.mxu0 0
    %137 = vmatpush1.bf16.msra.mxu0 0
    %138 = vmatprep.subr.bf16.mxu0 0
    %139 = vmatpush1.bf16.msra.mxu0 0
    %140 = vmatprep.subr.bf16.mxu0 0
    %141 = vmatpush1.bf16.msra.mxu0 0
    %142 = vmatprep.subr.bf16.mxu0 0
    %143 = vmatpush1.bf16.msra.mxu0 0
    %144 = vmatprep.mubr.bf16.mxu0 0
    %145 = vmatmul.mubr.bf16.gmra.mrb[0].mxu0 %v103
    %v146 = vpop.f32.mrb[0].mxu0
    %v147 = vadd.f32 %v76, %v146
    %v148 = vpop.f32.mrb[0].mxu0
    %v149 = vpop.f32.mrb[0].mxu0
    %v150 = vpop.f32.mrb[0].mxu0
    %151 = vdwg.mxu0
    %v152 = vmax.f32 %v147, 0.0
    %v153 = vpack.c.bf16 %v152, %v152
    %v154 = vld [vmem:[#allocation7] sm:$0xf]
    %v155 = vld [vmem:[#allocation7 + $0x4] sm:$0xf]
    %v156 = vld [vmem:[#allocation7 + $0x8] sm:$0xf]
    %v157 = vld [vmem:[#allocation7 + $0xc] sm:$0xf]
    %v158 = vld [vmem:[#allocation7 + $0x10] sm:$0xf]
    %v159 = vld [vmem:[#allocation7 + $0x14] sm:$0xf]
    %v160 = vld [vmem:[#allocation7 + $0x18] sm:$0xf]
    %v161 = vld [vmem:[#allocation7 + $0x1c] sm:$0xf]
    %v162 = vld [vmem:[#allocation7 + $0x20] sm:$0xf]
    %v163 = vld [vmem:[#allocation7 + $0x24] sm:$0xf]
    %v164 = vld [vmem:[#allocation7 + $0x28] sm:$0xf]
    %v165 = vld [vmem:[#allocation7 + $0x2c] sm:$0xf]
    %v166 = vld [vmem:[#allocation7 + $0x30] sm:$0xf]
    %v167 = vld [vmem:[#allocation7 + $0x34] sm:$0xf]
    %v168 = vld [vmem:[#allocation7 + $0x38] sm:$0xf]
    %v169 = vld [vmem:[#allocation7 + $0x3c] sm:$0xf]
    %v170 = vld [vmem:[%s4] sm:$0x1]
    %v172 = vlaneseq
    %v173 = vshrl.u32 %v172, 7
    %v174 = vsub.s32 0, %v173
    %v175 = vrot.slane %v170, %v174
    %v193 = vunpack.c.l.b16 %v154
    %v194 = vunpack.c.l.b16 %v155
    %v195 = vunpack.c.l.b16 %v156
    %v196 = vunpack.c.l.b16 %v157
    %v197 = vunpack.c.l.b16 %v158
    %v198 = vunpack.c.l.b16 %v159
    %v199 = vunpack.c.l.b16 %v160
    %v200 = vunpack.c.l.b16 %v161
    %v201 = vunpack.c.l.b16 %v162
    %v202 = vunpack.c.l.b16 %v163
    %v203 = vunpack.c.l.b16 %v164
    %v204 = vunpack.c.l.b16 %v165
    %v205 = vunpack.c.l.b16 %v166
    %v206 = vunpack.c.l.b16 %v167
    %v207 = vunpack.c.l.b16 %v168
    %v208 = vunpack.c.l.b16 %v169
    %v209 = vpack.c.b16 %v194, %v193
    %v210 = vpack.c.b16 %v196, %v195
    %v211 = vpack.c.b16 %v198, %v197
    %v212 = vpack.c.b16 %v200, %v199
    %v213 = vpack.c.b16 %v202, %v201
    %v214 = vpack.c.b16 %v204, %v203
    %v215 = vpack.c.b16 %v206, %v205
    %v216 = vpack.c.b16 %v208, %v207
    %225 = vmatprep.subr.bf16.mxu0 0
    %226 = vmatpush1.bf16.msra.mxu0 %v209
    %227 = vmatprep.subr.bf16.mxu0 0
    %228 = vmatpush1.bf16.msra.mxu0 %v210
    %229 = vmatprep.subr.bf16.mxu0 0
    %230 = vmatpush1.bf16.msra.mxu0 %v211
    %231 = vmatprep.subr.bf16.mxu0 0
    %232 = vmatpush1.bf16.msra.mxu0 %v212
    %233 = vmatprep.subr.bf16.mxu0 0
    %234 = vmatpush1.bf16.msra.mxu0 %v213
    %235 = vmatprep.subr.bf16.mxu0 0
    %236 = vmatpush1.bf16.msra.mxu0 %v214
    %237 = vmatprep.subr.bf16.mxu0 0
    %238 = vmatpush1.bf16.msra.mxu0 %v215
    %239 = vmatprep.subr.bf16.mxu0 0
    %240 = vmatpush1.bf16.msra.mxu0 %v216
    %241 = vmatprep.subr.bf16.mxu0 0
    %242 = vmatpush1.bf16.msra.mxu0 0
    %243 = vmatprep.subr.bf16.mxu0 0
    %244 = vmatpush1.bf16.msra.mxu0 0
    %245 = vmatprep.subr.bf16.mxu0 0
    %246 = vmatpush1.bf16.msra.mxu0 0
    %247 = vmatprep.subr.bf16.mxu0 0
    %248 = vmatpush1.bf16.msra.mxu0 0
    %249 = vmatprep.subr.bf16.mxu0 0
    %250 = vmatpush1.bf16.msra.mxu0 0
    %251 = vmatprep.subr.bf16.mxu0 0
    %252 = vmatpush1.bf16.msra.mxu0 0
    %253 = vmatprep.subr.bf16.mxu0 0
    %254 = vmatpush1.bf16.msra.mxu0 0
    %255 = vmatprep.subr.bf16.mxu0 0
    %256 = vmatpush1.bf16.msra.mxu0 0
    %257 = vmatprep.mubr.bf16.mxu0 0
    %258 = vmatmul.mubr.bf16.gmra.mrb[0].mxu0 %v153
    %v259 = vpop.f32.mrb[0].mxu0
    %v260 = vadd.f32 %v175, %v259
    %v261 = vpop.f32.mrb[0].mxu0
    %v262 = vpop.f32.mrb[0].mxu0
    %v263 = vpop.f32.mrb[0].mxu0
    %264 = vdwg.mxu0
    %v265 = vpack.c.bf16 %v260, %v260
    %266 = vst [vmem:[#allocation8] sm:$0xf] %v265
    // Predicated region
    $region34: #{tpu_custom_call.1} parent=1 // pred_check
      _
    $region35: #{tpu_custom_call.1} parent=1 // pred_check_branch
      %268 = sbr.rel (0) target = $region37
    $region36: #{tpu_custom_call.1} parent=1 // pred_region
      %s270 = ssub.s32 64, 64
      %271 = vsyncadd [#allocation4], %s270
      %s273 = sshll.u32 [#allocation8], 4
      %s274 = int_to_ptr.vmem [resolvable:$true] %s273
      %276 = dma.vmem_to_hbm [thread:$0]  %s274, 64, %s5, [#allocation4]
    $region37: #{tpu_custom_call.1} parent=1 // pred_fallthru
      _
    // Predicated region
    $region38: #{tpu_custom_call.1} parent=1 // pred_check
      _
    $region39: #{tpu_custom_call.1} parent=1 // pred_check_branch
      %278 = sbr.rel (0) target = $region41
    $region40: #{tpu_custom_call.1} parent=1 // pred_region
      %279 = dma.done [#allocation4], 64
    $region41: #{tpu_custom_call.1} parent=1 // pred_fallthru
      _
    %280 = vsyncpa [#allocation3], 1
    %281 = vsyncpa [#allocation6], 1
    %282 = vsyncpa [#allocation4], 1

// kernel: tpu_custom_call.1
$region0: #{tpu_custom_call.1}
  #allocation0 [shape = 'u32[]', space=smem, size = 0x4, offset = 0x4, fixed_abs, tag = 'smem constant byte address 0x4 - core index']
  #allocation1 [shape = 'u32[144,128]{1,0:T(1,128)}', space=vmem, size = 0x12000, scoped, tag = 'internal scratch']
  %s0 = inlined_call_operand.hbm [shape: f32[8,63], index: 0, kind: input, shape index: {}]
  %s1 = inlined_call_operand.hbm [shape: bf16[63,128], index: 1, kind: input, shape index: {}]
  %s2 = inlined_call_operand.vmem [shape: f32[1,128], index: 2, kind: input, shape index: {}]
  %s3 = inlined_call_operand.hbm [shape: bf16[128,128], index: 3, kind: input, shape index: {}]
  %s4 = inlined_call_operand.vmem [shape: f32[1,128], index: 4, kind: input, shape index: {}]
  %s5 = inlined_call_operand.hbm [shape: bf16[8,128], index: 5, kind: output, shape index: {}]
  %s6 = sld [smem:[#allocation0]]
  $region42: #{tpu_custom_call.1} parent=0
    _
  %s8 = ssub.s32 1, %s6
  %s9 = scalar_select 0, %s8, %s6
  $region1: #{tpu_custom_call.1} parent=0
    #allocation2 [shape = 'u8[4096]{0}', space=vmem, size = 0x1000, scoped, tag = 'input window, operand 0, single buffered']
    #allocation3 [shape = 's32[1]{0}', space=sflag, size = 0x4, scoped, tag = 'scoped memory for tpu_custom_call.1']
    #allocation4 [shape = 's32[1]{0}', space=sflag, size = 0x4, scoped, tag = 'scoped memory for tpu_custom_call.1']
    #allocation5 [shape = 'u8[16384]{0}', space=vmem, size = 0x4000, scoped, tag = 'input window, operand 1, single buffered']
    #allocation6 [shape = 's32[1]{0}', space=sflag, size = 0x4, scoped, tag = 'scoped memory for tpu_custom_call.1']
    #allocation7 [shape = 'u8[32768]{0}', space=vmem, size = 0x8000, scoped, tag = 'input window, operand 3, single buffered']
    #allocation8 [shape = 'u8[2048]{0}', space=vmem, size = 0x800, scoped, tag = 'output window, operand 0, single buffered']
    %10 = vsyncpa [#allocation3], 0
    %11 = vsyncpa [#allocation6], 0
    %12 = vsyncpa [#allocation4], 0
    // Predicated region
    $region2: #{tpu_custom_call.1} parent=1 // pred_check
      _
    $region3: #{tpu_custom_call.1} parent=1 // pred_check_branch
      %14 = sbr.rel (0) target = $region5
    $region4: #{tpu_custom_call.1} parent=1 // pred_region
      %s16 = ssub.s32 128, 128
      %17 = vsyncadd [#allocation3], %s16
      %s19 = sshll.u32 [#allocation2], 4
      %s20 = int_to_ptr.vmem [resolvable:$true] %s19
      %22 = dma.hbm_to_vmem [thread:$0]  %s0, 128, %s20, [#allocation3]
    $region5: #{tpu_custom_call.1} parent=1 // pred_fallthru
      _
    // Predicated region
    $region6: #{tpu_custom_call.1} parent=1 // pred_check
      _
    $region7: #{tpu_custom_call.1} parent=1 // pred_check_branch
      %24 = sbr.rel (0) target = $region9
    $region8: #{tpu_custom_call.1} parent=1 // pred_region
      %s26 = ssub.s32 512, 512
      %27 = vsyncadd [#allocation6], %s26
      %s28 = sshll.u32 [#allocation5], 4
      %s29 = int_to_ptr.vmem [resolvable:$true] %s28
      %34 = dma.hbm_to_vmem [thread:$0]  %s1, 512, %s29, [#allocation6], 64, 64, 4
    $region9: #{tpu_custom_call.1} parent=1 // pred_fallthru
      _
    // Predicated region
    $region10: #{tpu_custom_call.1} parent=1 // pred_check
      _
    $region11: #{tpu_custom_call.1} parent=1 // pred_check_branch
      %36 = sbr.rel (0) target = $region13
    $region12: #{tpu_custom_call.1} parent=1 // pred_region
      _
    $region13: #{tpu_custom_call.1} parent=1 // pred_fallthru
      _
    // Predicated region
    $region14: #{tpu_custom_call.1} parent=1 // pred_check
      _
    $region15: #{tpu_custom_call.1} parent=1 // pred_check_branch
      %38 = sbr.rel (0) target = $region17
    $region16: #{tpu_custom_call.1} parent=1 // pred_region
      %s40 = ssub.s32 1024, 1024
      %41 = vsyncadd [#allocation6], %s40
      %s42 = sshll.u32 [#allocation7], 4
      %s43 = int_to_ptr.vmem [resolvable:$true] %s42
      %48 = dma.hbm_to_vmem [thread:$0]  %s3, 1024, %s43, [#allocation6], 64, 64, 4
    $region17: #{tpu_custom_call.1} parent=1 // pred_fallthru
      _
    // Predicated region
    $region18: #{tpu_custom_call.1} parent=1 // pred_check
      _
    $region19: #{tpu_custom_call.1} parent=1 // pred_check_branch
      %50 = sbr.rel (0) target = $region21
    $region20: #{tpu_custom_call.1} parent=1 // pred_region
      _
    $region21: #{tpu_custom_call.1} parent=1 // pred_fallthru
      _
    // Predicated region
    $region22: #{tpu_custom_call.1} parent=1 // pred_check
      _
    $region23: #{tpu_custom_call.1} parent=1 // pred_check_branch
      %52 = sbr.rel (0) target = $region25
    $region24: #{tpu_custom_call.1} parent=1 // pred_region
      %53 = dma.done [#allocation3], 128
    $region25: #{tpu_custom_call.1} parent=1 // pred_fallthru
      _
    // Predicated region
    $region26: #{tpu_custom_call.1} parent=1 // pred_check
      _
    $region27: #{tpu_custom_call.1} parent=1 // pred_check_branch
      %55 = sbr.rel (0) target = $region29
    $region28: #{tpu_custom_call.1} parent=1 // pred_region
      %56 = dma.done [#allocation6], 512
    $region29: #{tpu_custom_call.1} parent=1 // pred_fallthru
      _
    // Predicated region
    $region30: #{tpu_custom_call.1} parent=1 // pred_check
      _
    $region31: #{tpu_custom_call.1} parent=1 // pred_check_branch
      %58 = sbr.rel (0) target = $region33
    $region32: #{tpu_custom_call.1} parent=1 // pred_region
      %59 = dma.done [#allocation6], 1024
    $region33: #{tpu_custom_call.1} parent=1 // pred_fallthru
      _
    %v61 = vld [vmem:[#allocation2] sm:$0xff]
    %v62 = vpack.c.bf16 %v61, %v61
    %v63 = vld [vmem:[#allocation5] sm:$0xf]
    %v64 = vld [vmem:[#allocation5 + $0x4] sm:$0xf]
    %v65 = vld [vmem:[#allocation5 + $0x8] sm:$0xf]
    %v66 = vld [vmem:[#allocation5 + $0xc] sm:$0xf]
    %v67 = vld [vmem:[#allocation5 + $0x10] sm:$0xf]
    %v68 = vld [vmem:[#allocation5 + $0x14] sm:$0xf]
    %v69 = vld [vmem:[#allocation5 + $0x18] sm:$0xf]
    %v70 = vld [vmem:[#allocation5 + $0x1c] sm:$0xf]
    %v71 = vld [vmem:[%s2] sm:$0x1]
    %v73 = vlaneseq
    %v74 = vshrl.u32 %v73, 7
    %v75 = vsub.s32 0, %v74
    %v76 = vrot.slane %v71, %v75
    %v86 = vunpack.c.l.b16 %v63
    %v87 = vunpack.c.l.b16 %v64
    %v88 = vunpack.c.l.b16 %v65
    %v89 = vunpack.c.l.b16 %v66
    %v90 = vunpack.c.l.b16 %v67
    %v91 = vunpack.c.l.b16 %v68
    %v92 = vunpack.c.l.b16 %v69
    %v93 = vunpack.c.l.b16 %v70
    %v94 = vpack.c.b16 %v87, %v86
    %v95 = vpack.c.b16 %v89, %v88
    %v96 = vpack.c.b16 %v91, %v90
    %v97 = vpack.c.b16 %v93, %v92
    %vm101 = vcmask 515072
    %v103 = vsel %vm101, %v62, 0
    %vm105 = vcmask 1046528
    %vm106 = vcmask 1047552
    %v107 = vsel %vm105, 4294967295, 65535
    %v108 = vsel %vm106, %v107, 0
    %v110 = vand.u32 %v97, %v108
    %112 = vmatprep.subr.bf16.mxu0 0
    %113 = vmatpush1.bf16.msra.mxu0 %v94
    %114 = vmatprep.subr.bf16.mxu0 0
    %115 = vmatpush1.bf16.msra.mxu0 %v95
    %116 = vmatprep.subr.bf16.mxu0 0
    %117 = vmatpush1.bf16.msra.mxu0 %v96
    %118 = vmatprep.subr.bf16.mxu0 0
    %119 = vmatpush1.bf16.msra.mxu0 %v110
    %120 = vmatprep.subr.bf16.mxu0 0
    %121 = vmatpush1.bf16.msra.mxu0 0
    %122 = vmatprep.subr.bf16.mxu0 0
    %123 = vmatpush1.bf16.msra.mxu0 0
    %124 = vmatprep.subr.bf16.mxu0 0
    %125 = vmatpush1.bf16.msra.mxu0 0
    %126 = vmatprep.subr.bf16.mxu0 0
    %127 = vmatpush1.bf16.msra.mxu0 0
    %128 = vmatprep.subr.bf16.mxu0 0
    %129 = vmatpush1.bf16.msra.mxu0 0
    %130 = vmatprep.subr.bf16.mxu0 0
    %131 = vmatpush1.bf16.msra.mxu0 0
    %132 = vmatprep.subr.bf16.mxu0 0
    %133 = vmatpush1.bf16.msra.mxu0 0
    %134 = vmatprep.subr.bf16.mxu0 0
    %135 = vmatpush1.bf16.msra.mxu0 0
    %136 = vmatprep.subr.bf16.mxu0 0
    %137 = vmatpush1.bf16.msra.mxu0 0
    %138 = vmatprep.subr.bf16.mxu0 0
    %139 = vmatpush1.bf16.msra.mxu0 0
    %140 = vmatprep.subr.bf16.mxu0 0
    %141 = vmatpush1.bf16.msra.mxu0 0
    %142 = vmatprep.subr.bf16.mxu0 0
    %143 = vmatpush1.bf16.msra.mxu0 0
    %144 = vmatprep.mubr.bf16.mxu0 0
    %145 = vmatmul.mubr.bf16.gmra.mrb[0].mxu0 %v103
    %v146 = vpop.f32.mrb[0].mxu0
    %v147 = vadd.f32 %v76, %v146
    %v148 = vpop.f32.mrb[0].mxu0
    %v149 = vpop.f32.mrb[0].mxu0
    %v150 = vpop.f32.mrb[0].mxu0
    %151 = vdwg.mxu0
    %v152 = vmax.f32 %v147, 0.0
    %v153 = vpack.c.bf16 %v152, %v152
    %v154 = vld [vmem:[#allocation7] sm:$0xf]
    %v155 = vld [vmem:[#allocation7 + $0x4] sm:$0xf]
    %v156 = vld [vmem:[#allocation7 + $0x8] sm:$0xf]
    %v157 = vld [vmem:[#allocation7 + $0xc] sm:$0xf]
    %v158 = vld [vmem:[#allocation7 + $0x10] sm:$0xf]
    %v159 = vld [vmem:[#allocation7 + $0x14] sm:$0xf]
    %v160 = vld [vmem:[#allocation7 + $0x18] sm:$0xf]
    %v161 = vld [vmem:[#allocation7 + $0x1c] sm:$0xf]
    %v162 = vld [vmem:[#allocation7 + $0x20] sm:$0xf]
    %v163 = vld [vmem:[#allocation7 + $0x24] sm:$0xf]
    %v164 = vld [vmem:[#allocation7 + $0x28] sm:$0xf]
    %v165 = vld [vmem:[#allocation7 + $0x2c] sm:$0xf]
    %v166 = vld [vmem:[#allocation7 + $0x30] sm:$0xf]
    %v167 = vld [vmem:[#allocation7 + $0x34] sm:$0xf]
    %v168 = vld [vmem:[#allocation7 + $0x38] sm:$0xf]
    %v169 = vld [vmem:[#allocation7 + $0x3c] sm:$0xf]
    %v170 = vld [vmem:[%s4] sm:$0x1]
    %v172 = vlaneseq
    %v173 = vshrl.u32 %v172, 7
    %v174 = vsub.s32 0, %v173
    %v175 = vrot.slane %v170, %v174
    %v193 = vunpack.c.l.b16 %v154
    %v194 = vunpack.c.l.b16 %v155
    %v195 = vunpack.c.l.b16 %v156
    %v196 = vunpack.c.l.b16 %v157
    %v197 = vunpack.c.l.b16 %v158
    %v198 = vunpack.c.l.b16 %v159
    %v199 = vunpack.c.l.b16 %v160
    %v200 = vunpack.c.l.b16 %v161
    %v201 = vunpack.c.l.b16 %v162
    %v202 = vunpack.c.l.b16 %v163
    %v203 = vunpack.c.l.b16 %v164
    %v204 = vunpack.c.l.b16 %v165
    %v205 = vunpack.c.l.b16 %v166
    %v206 = vunpack.c.l.b16 %v167
    %v207 = vunpack.c.l.b16 %v168
    %v208 = vunpack.c.l.b16 %v169
    %v209 = vpack.c.b16 %v194, %v193
    %v210 = vpack.c.b16 %v196, %v195
    %v211 = vpack.c.b16 %v198, %v197
    %v212 = vpack.c.b16 %v200, %v199
    %v213 = vpack.c.b16 %v202, %v201
    %v214 = vpack.c.b16 %v204, %v203
    %v215 = vpack.c.b16 %v206, %v205
    %v216 = vpack.c.b16 %v208, %v207
    %225 = vmatprep.subr.bf16.mxu0 0
    %226 = vmatpush1.bf16.msra.mxu0 %v209
    %227 = vmatprep.subr.bf16.mxu0 0
    %228 = vmatpush1.bf16.msra.mxu0 %v210
    %229 = vmatprep.subr.bf16.mxu0 0
    %230 = vmatpush1.bf16.msra.mxu0 %v211
    %231 = vmatprep.subr.bf16.mxu0 0
    %232 = vmatpush1.bf16.msra.mxu0 %v212
    %233 = vmatprep.subr.bf16.mxu0 0
    %234 = vmatpush1.bf16.msra.mxu0 %v213
    %235 = vmatprep.subr.bf16.mxu0 0
    %236 = vmatpush1.bf16.msra.mxu0 %v214
    %237 = vmatprep.subr.bf16.mxu0 0
    %238 = vmatpush1.bf16.msra.mxu0 %v215
    %239 = vmatprep.subr.bf16.mxu0 0
    %240 = vmatpush1.bf16.msra.mxu0 %v216
    %241 = vmatprep.subr.bf16.mxu0 0
    %242 = vmatpush1.bf16.msra.mxu0 0
    %243 = vmatprep.subr.bf16.mxu0 0
    %244 = vmatpush1.bf16.msra.mxu0 0
    %245 = vmatprep.subr.bf16.mxu0 0
    %246 = vmatpush1.bf16.msra.mxu0 0
    %247 = vmatprep.subr.bf16.mxu0 0
    %248 = vmatpush1.bf16.msra.mxu0 0
    %249 = vmatprep.subr.bf16.mxu0 0
    %250 = vmatpush1.bf16.msra.mxu0 0
    %251 = vmatprep.subr.bf16.mxu0 0
    %252 = vmatpush1.bf16.msra.mxu0 0
    %253 = vmatprep.subr.bf16.mxu0 0
    %254 = vmatpush1.bf16.msra.mxu0 0
    %255 = vmatprep.subr.bf16.mxu0 0
    %256 = vmatpush1.bf16.msra.mxu0 0
    %257 = vmatprep.mubr.bf16.mxu0 0
    %258 = vmatmul.mubr.bf16.gmra.mrb[0].mxu0 %v153
    %v259 = vpop.f32.mrb[0].mxu0
    %v260 = vadd.f32 %v175, %v259
    %v261 = vpop.f32.mrb[0].mxu0
    %v262 = vpop.f32.mrb[0].mxu0
    %v263 = vpop.f32.mrb[0].mxu0
    %264 = vdwg.mxu0
    %v265 = vpack.c.bf16 %v260, %v260
    %266 = vst [vmem:[#allocation8] sm:$0xf] %v265
    // Predicated region
    $region34: #{tpu_custom_call.1} parent=1 // pred_check
      _
    $region35: #{tpu_custom_call.1} parent=1 // pred_check_branch
      %268 = sbr.rel (0) target = $region37
    $region36: #{tpu_custom_call.1} parent=1 // pred_region
      %s270 = ssub.s32 64, 64
      %271 = vsyncadd [#allocation4], %s270
      %s273 = sshll.u32 [#allocation8], 4
      %s274 = int_to_ptr.vmem [resolvable:$true] %s273
      %276 = dma.vmem_to_hbm [thread:$0]  %s274, 64, %s5, [#allocation4]
    $region37: #{tpu_custom_call.1} parent=1 // pred_fallthru
      _
    // Predicated region
    $region38: #{tpu_custom_call.1} parent=1 // pred_check
      _
    $region39: #{tpu_custom_call.1} parent=1 // pred_check_branch
      %278 = sbr.rel (0) target = $region41
    $region40: #{tpu_custom_call.1} parent=1 // pred_region
      %279 = dma.done [#allocation4], 64
    $region41: #{tpu_custom_call.1} parent=1 // pred_fallthru
      _
    %280 = vsyncpa [#allocation3], 1
    %281 = vsyncpa [#allocation6], 1
    %282 = vsyncpa [#allocation4], 1

</llo_original>
